<compile_context>
chip_gen: v6e
topology: v6e:2x2x1
jax: 0.10.0
libtpu: 0.0.40
codegen_flags: <defaults>
</compile_context>

<pallas_src>
import functools

import jax
import jax.numpy as jnp
from jax.experimental import pallas as pl
from jax.experimental.pallas import tpu as pltpu


def _identity_copy_kernel(x_ref, o_ref):
    # Identity copy of one lane-dense (TN, TF) tile.  The NCHW reshape is
    # metadata-only and is done in the wrapper.
    o_ref[...] = x_ref[...]


def _sublane_multiple(dtype) -> int:
    # Second-to-last-dim packing multiple: 8 (4-byte), 16 (2-byte), 32 (1-byte).
    return {4: 8, 2: 16, 1: 32}.get(jnp.dtype(dtype).itemsize, 8)


@functools.partial(jax.jit, static_argnums=(1, 2, 3))
def unflatten(x: jax.Array, C: int, H: int, W: int) -> jax.Array:
    """Pallas equivalent of Unflatten(N=-1, C, H, W).forward(x).

    x: (N, C*H*W) array (row-major, i.e. a flattened contiguous NCHW tensor).
    Returns an (N, C, H, W) array.
    """
    N, F = x.shape
    if F != C * H * W:
        raise ValueError(f"expected last dim {C * H * W}, got {F}")

    sub = _sublane_multiple(x.dtype)
    # Lane-dense tile: multiple of 128 (never tile F below 128); if F is not a
    # multiple of 128, keep the full F extent (always a legal block shape).
    TF = min(F, 2048) if F % 128 == 0 else F
    # Sublane tile: multiple of the dtype's packing; otherwise full N extent.
    TN = min(N, 128) if N % sub == 0 else N

    grid = (pl.cdiv(N, TN), pl.cdiv(F, TF))

    flat = pl.pallas_call(
        _identity_copy_kernel,
        out_shape=jax.ShapeDtypeStruct((N, F), x.dtype),
        grid=grid,
        in_specs=[pl.BlockSpec((TN, TF), lambda i, j: (i, j))],
        out_specs=pl.BlockSpec((TN, TF), lambda i, j: (i, j)),
        # Output aliases the input buffer: XLA does not need to allocate and
        # fill a second (N, F) HBM buffer (true zero-copy when the caller
        # donates x at a jit boundary).
        input_output_aliases={0: 0},
        compiler_params=pltpu.CompilerParams(
            dimension_semantics=("parallel", "parallel"),
        ),
    )(x)

    # Pure metadata reshape (matches torch.Tensor.view on a contiguous tensor).
    return flat.reshape(N, C, H, W)


if __name__ == "__main__":
    # Small shape consistent with the module's forward:
    # N=2, C=4, H=16, W=16  ->  x has shape (2, 4*16*16) = (2, 1024)
    N, C, H, W = 2, 4, 16, 16
    key = jax.random.PRNGKey(0)
    x = jax.random.normal(key, (N, C * H * W), dtype=jnp.float32)

    ref = x.reshape(N, C, H, W)          # pure-JAX reference (== torch .view)
    out = jax.block_until_ready(unflatten(x, C, H, W))

    assert out.shape == (N, C, H, W)
    assert out.dtype == x.dtype
    assert jnp.array_equal(out, ref)

    # Second, slightly larger (still small) shape to exercise the tiled,
    # multi-block parallel grid path: (16, 32*16*16) = (16, 8192).
    N2, C2, H2, W2 = 16, 32, 16, 16
    x2 = jax.random.normal(jax.random.PRNGKey(0), (N2, C2 * H2 * W2),
                           dtype=jnp.float32)
    out2 = jax.block_until_ready(unflatten(x2, C2, H2, W2))
    assert out2.shape == (N2, C2, H2, W2)
    assert jnp.array_equal(out2, x2.reshape(N2, C2, H2, W2))

    print("KERNEL_OK")
</pallas_src>

<mosaic_0001>
module attributes {stable_mosaic.version = 11 : i64} {
  func.func @_identity_copy_kernel(%arg0: i32, %arg1: i32, %arg2: memref<2x1024xf32, #tpu.memory_space<vmem>>, %arg3: memref<2x1024xf32, #tpu.memory_space<vmem>>) attributes {dimension_semantics = [#tpu.dimension_semantics<parallel>, #tpu.dimension_semantics<parallel>], iteration_bounds = array<i64: 1, 1>, scalar_prefetch = 0 : i64, scratch_operands = 0 : i64, tpu.core_type = #tpu.core_type<tc>, window_params = [{transform_indices = @transform_0, window_bounds = array<i64: 2, 1024>}, {transform_indices = @transform_1, window_bounds = array<i64: 2, 1024>}]} {
    %c0 = arith.constant 0 : index
    %c0_0 = arith.constant 0 : index
    %0 = vector.load %arg2[%c0, %c0_0] : memref<2x1024xf32, #tpu.memory_space<vmem>>, vector<2x1024xf32>
    %c0_1 = arith.constant 0 : index
    %c0_2 = arith.constant 0 : index
    %1 = vector.load %arg3[%c0_1, %c0_2] : memref<2x1024xf32, #tpu.memory_space<vmem>>, vector<2x1024xf32>
    tpu.vector_store %arg3[%c0_1, %c0_2], %0 {strides = array<i32>} : memref<2x1024xf32, #tpu.memory_space<vmem>>, vector<2x1024xf32>,
    return
  }
  func.func @transform_0(%arg0: i32, %arg1: i32) -> (i32, i32) {
    %c0_i32 = arith.constant 0 : i32
    return %arg0, %arg1 : i32, i32
  }
  func.func @transform_1(%arg0: i32, %arg1: i32) -> (i32, i32) {
    %c0_i32 = arith.constant 0 : i32
    return %arg0, %arg1 : i32, i32
  }
}

</mosaic_0001>

<llo_original>
// kernel: unflatten.1
$region0: #{unflatten.1}
  #allocation0 [shape = 'u32[]', space=smem, size = 0x4, offset = 0x4, fixed_abs, tag = 'smem constant byte address 0x4 - core index']
  #allocation1 [shape = 'u32[144,128]{1,0:T(1,128)}', space=vmem, size = 0x12000, scoped, tag = 'internal scratch']
  %s0 = inlined_call_operand.vmem [shape: f32[2,1024], index: 0, kind: input, shape index: {}, may-alias: {0,1}]
  %s1 = inlined_call_operand.vmem [shape: f32[2,1024], index: 1, kind: output, shape index: {}, may-alias: {0,1}]
  %s2 = sld [smem:[#allocation0]]
  $region14: #{unflatten.1} parent=0
    _
  %s4 = ssub.s32 1, %s2
  %s5 = scalar_select 0, %s4, %s2
  // Predicated region
  $region2: #{unflatten.1} parent=0 // pred_check
    _
  $region3: #{unflatten.1} parent=0 // pred_check_branch
    %7 = sbr.rel (0) target = $region5
  $region4: #{unflatten.1} parent=0 // pred_region
    _
  $region5: #{unflatten.1} parent=0 // pred_fallthru
    _
  %v8 = vld [vmem:[%s0] sm:$0xff]
  %v9 = vld [vmem:[%s0 + $0x8] sm:$0xff]
  %10 = vst [vmem:[%s1] sm:$0xff] %v8
  %11 = vst [vmem:[%s1 + $0x8] sm:$0xff] %v9
  // Predicated region
  $region6: #{unflatten.1} parent=0 // pred_check
    _
  $region7: #{unflatten.1} parent=0 // pred_check_branch
    %13 = sbr.rel (0) target = $region9
  $region8: #{unflatten.1} parent=0 // pred_region
    _
  $region9: #{unflatten.1} parent=0 // pred_fallthru
    _
  // Predicated region
  $region10: #{unflatten.1} parent=0 // pred_check
    _
  $region11: #{unflatten.1} parent=0 // pred_check_branch
    %15 = sbr.rel (0) target = $region13
  $region12: #{unflatten.1} parent=0 // pred_region
    _
  $region13: #{unflatten.1} parent=0 // pred_fallthru
    _

</llo_original>
